<compile_context>
chip_gen: v5e
topology: v5e:2x2
jax: 0.10.0
libtpu: 0.0.40
codegen_flags: <defaults>
</compile_context>

<pallas_src>
import functools

import jax
import jax.numpy as jnp
from jax.experimental import pallas as pl
from jax.experimental.pallas import tpu as pltpu


# ------------------------------ Fused Pallas kernel ---------------------------------
def _fused_kernel(x_ref, w1_ref, b1_ref, w2_ref, b2_ref,
                  hw1_ref, hb1_ref, hw2_ref, hb2_ref, o_ref):
    # Stage 1: shared UnitModule applied to all units at once via block-diagonal
    # weights.  x is (rows, U*F); result is (rows, U*O) already in concat lane order.
    h = jnp.dot(x_ref[...], w1_ref[...], preferred_element_type=jnp.float32) + b1_ref[...]
    h = jnp.maximum(h, 0.0)
    u = jnp.dot(h, w2_ref[...], preferred_element_type=jnp.float32) + b2_ref[...]
    u = jnp.maximum(u, 0.0)

    # Stage 2: head fc1 (+relu) then fc2 (no final relu, zero-padded to 128 lanes).
    h2 = jnp.dot(u, hw1_ref[...], preferred_element_type=jnp.float32) + hb1_ref[...]
    h2 = jnp.maximum(h2, 0.0)
    y = jnp.dot(h2, hw2_ref[...], preferred_element_type=jnp.float32) + hb2_ref[...]
    o_ref[...] = y.astype(o_ref.dtype)


# ------------------------------ Jitted forward wrapper -------------------------------
@functools.partial(jax.jit, static_argnames=("out_dim",))
def forward(kparams, x, *, out_dim):
    w1, b1, w2, b2, hw1, hb1, hw2p, hb2p = kparams
    rows = x.shape[0]
    s_pad = hw2p.shape[1]

    # Advisory cost estimate (block-diagonal math, padded final layer).
    uf, ufh = w1.shape
    uo = w2.shape[1]
    half_s = hw1.shape[1]
    flops = 2 * rows * (uf * ufh + ufh * uo + uo * half_s + half_s * s_pad)
    bytes_accessed = 4 * (x.size + sum(int(p.size) for p in kparams) + rows * s_pad)

    vmem = pl.BlockSpec(memory_space=pltpu.MemorySpace.VMEM)   # whole arrays, no grid
    y = pl.pallas_call(
        _fused_kernel,
        out_shape=jax.ShapeDtypeStruct((rows, s_pad), jnp.float32),
        in_specs=[vmem] * 9,
        out_specs=vmem,
        cost_estimate=pl.CostEstimate(flops=flops, transcendentals=0,
                                      bytes_accessed=bytes_accessed),
    )(x, w1, b1, w2, b2, hw1, hb1, hw2p, hb2p)

    # Slice away the lane padding, then match PyTorch's unsqueeze(0) output shape.
    return y[:, :out_dim].reshape(1, rows, out_dim)


# ------------------------------------ Parameters ------------------------------------
def init_linear(key, fan_in, fan_out):
    """PyTorch nn.Linear default init: U(-1/sqrt(fan_in), +1/sqrt(fan_in))."""
    kw, kb = jax.random.split(key)
    bound = 1.0 / (fan_in ** 0.5)
    w = jax.random.uniform(kw, (fan_in, fan_out), jnp.float32, -bound, bound)  # (in, out) = W.T
    b = jax.random.uniform(kb, (1, fan_out), jnp.float32, -bound, bound)
    return w, b


class UnitTypeModulePallas:
    def __init__(self, unit_count, feature_count, unit_ins, unit_outs, unit_s_outs, key):
        assert feature_count == unit_ins, \
            "forward slices feature_count cols into a Linear(unit_ins, ...)"
        self.unit_count = unit_count
        self.feature_count = feature_count
        self.unit_outs = unit_outs
        self.unit_s_ins = unit_count * unit_outs
        self.unit_s_outs = unit_s_outs

        k1, k2, k3, k4 = jax.random.split(key, 4)
        # UnitModule: Linear(unit_ins, unit_ins//2), Linear(unit_ins//2, unit_outs)
        uw1, ub1 = init_linear(k1, unit_ins, unit_ins // 2)
        uw2, ub2 = init_linear(k2, unit_ins // 2, unit_outs)
        # Head: Linear(unit_s_ins, unit_s_ins//2), Linear(unit_s_ins//2, unit_s_outs)
        hw1, hb1 = init_linear(k3, self.unit_s_ins, self.unit_s_ins // 2)
        hw2, hb2 = init_linear(k4, self.unit_s_ins // 2, unit_s_outs)
        self.params = (uw1, ub1, uw2, ub2, hw1, hb1, hw2, hb2)   # original (reference)

        # ---- Precompute kernel operands (done once, not per forward) ----
        U = unit_count
        eye_u = jnp.eye(U, dtype=jnp.float32)
        # Block-diagonal shared unit weights: unit u's features -> unit u's outputs.
        w1_bd = jnp.kron(eye_u, uw1)                 # (U*F, U*F//2)
        b1_bd = jnp.tile(ub1, (1, U))                # (1, U*F//2)
        w2_bd = jnp.kron(eye_u, uw2)                 # (U*F//2, U*O)
        b2_bd = jnp.tile(ub2, (1, U))                # (1, U*O)
        # Zero-pad the final layer to a full 128-lane output for an unmasked store.
        s_pad = max(pl.cdiv(unit_s_outs, 128) * 128, 128)
        hw2p = jnp.zeros((hw2.shape[0], s_pad), jnp.float32).at[:, :unit_s_outs].set(hw2)
        hb2p = jnp.zeros((1, s_pad), jnp.float32).at[:, :unit_s_outs].set(hb2)
        self.kparams = (w1_bd, b1_bd, w2_bd, b2_bd, hw1, hb1, hw2p, hb2p)

    def __call__(self, x):
        # x: (rows, unit_count * feature_count)
        return forward(self.kparams, x, out_dim=self.unit_s_outs)


# --------------------------------- Pure-JAX reference --------------------------------
def _reference(mod, x):
    uw1, ub1, uw2, ub2, hw1, hb1, hw2, hb2 = mod.params
    rows = x.shape[0]
    U, F, O = mod.unit_count, mod.feature_count, mod.unit_outs
    xs = x.reshape(rows, U, F).reshape(rows * U, F)
    h = jnp.maximum(xs @ uw1 + ub1, 0.0)
    u = jnp.maximum(h @ uw2 + ub2, 0.0)
    units_s = u.reshape(rows, U, O).reshape(rows, U * O)
    h2 = jnp.maximum(units_s @ hw1 + hb1, 0.0)
    y = h2 @ hw2 + hb2
    return y.reshape(1, rows, mod.unit_s_outs)


# --------------------------------------- Main ----------------------------------------
if __name__ == "__main__":
    key = jax.random.PRNGKey(0)
    k_params, k_x = jax.random.split(key)

    # Small shapes consistent with the module's forward.
    unit_count = 8
    feature_count = 32     # == unit_ins
    unit_ins = 32
    unit_outs = 16
    unit_s_outs = 32
    rows = 2               # forward always takes iloc[0:2, ...]

    mod = UnitTypeModulePallas(unit_count, feature_count, unit_ins, unit_outs,
                               unit_s_outs, k_params)

    x = jax.random.normal(k_x, (rows, unit_count * feature_count), dtype=jnp.float32)

    out = jax.block_until_ready(mod(x))

    ref = _reference(mod, x)
    assert out.shape == (1, rows, unit_s_outs)
    assert bool(jnp.allclose(out, ref, atol=1e-5, rtol=1e-5))

    print("KERNEL_OK")
</pallas_src>

<mosaic_0001>
module attributes {stable_mosaic.version = 11 : i64} {
  func.func @_fused_kernel(%arg0: memref<2x256xf32, #tpu.memory_space<vmem>>, %arg1: memref<256x128xf32, #tpu.memory_space<vmem>>, %arg2: memref<1x128xf32, #tpu.memory_space<vmem>>, %arg3: memref<128x128xf32, #tpu.memory_space<vmem>>, %arg4: memref<1x128xf32, #tpu.memory_space<vmem>>, %arg5: memref<128x64xf32, #tpu.memory_space<vmem>>, %arg6: memref<1x64xf32, #tpu.memory_space<vmem>>, %arg7: memref<64x128xf32, #tpu.memory_space<vmem>>, %arg8: memref<1x128xf32, #tpu.memory_space<vmem>>, %arg9: memref<2x128xf32, #tpu.memory_space<vmem>>) attributes {dimension_semantics = [], scalar_prefetch = 0 : i64, scratch_operands = 0 : i64, tpu.core_type = #tpu.core_type<tc>} {
    %c0 = arith.constant 0 : index
    %c0_0 = arith.constant 0 : index
    %0 = vector.load %arg0[%c0, %c0_0] : memref<2x256xf32, #tpu.memory_space<vmem>>, vector<2x256xf32>
    %c0_1 = arith.constant 0 : index
    %c0_2 = arith.constant 0 : index
    %1 = vector.load %arg1[%c0_1, %c0_2] : memref<256x128xf32, #tpu.memory_space<vmem>>, vector<256x128xf32>
    %cst = arith.constant dense<0.000000e+00> : vector<2x128xf32>
    %2 = tpu.matmul %0, %1, %cst {dimension_numbers = #tpu.dot_dimension_numbers<[1], [0], [0], [1], [0, 0, 1, 1], [], []>} : vector<2x256xf32>, vector<256x128xf32>, vector<2x128xf32> -> vector<2x128xf32>
    %c0_3 = arith.constant 0 : index
    %c0_4 = arith.constant 0 : index
    %3 = vector.load %arg2[%c0_3, %c0_4] : memref<1x128xf32, #tpu.memory_space<vmem>>, vector<1x128xf32>
    %4 = vector.broadcast %3 : vector<1x128xf32> to vector<2x128xf32>
    %5 = arith.addf %2, %4 : vector<2x128xf32>
    %cst_5 = arith.constant 0.000000e+00 : f32
    %6 = vector.broadcast %cst_5 : f32 to vector<2x128xf32>
    %7 = arith.maximumf %5, %6 : vector<2x128xf32>
    %c0_6 = arith.constant 0 : index
    %c0_7 = arith.constant 0 : index
    %8 = vector.load %arg3[%c0_6, %c0_7] : memref<128x128xf32, #tpu.memory_space<vmem>>, vector<128x128xf32>
    %cst_8 = arith.constant dense<0.000000e+00> : vector<2x128xf32>
    %9 = tpu.matmul %7, %8, %cst_8 {dimension_numbers = #tpu.dot_dimension_numbers<[1], [0], [0], [1], [0, 0, 1, 1], [], []>} : vector<2x128xf32>, vector<128x128xf32>, vector<2x128xf32> -> vector<2x128xf32>
    %c0_9 = arith.constant 0 : index
    %c0_10 = arith.constant 0 : index
    %10 = vector.load %arg4[%c0_9, %c0_10] : memref<1x128xf32, #tpu.memory_space<vmem>>, vector<1x128xf32>
    %11 = vector.broadcast %10 : vector<1x128xf32> to vector<2x128xf32>
    %12 = arith.addf %9, %11 : vector<2x128xf32>
    %cst_11 = arith.constant 0.000000e+00 : f32
    %13 = vector.broadcast %cst_11 : f32 to vector<2x128xf32>
    %14 = arith.maximumf %12, %13 : vector<2x128xf32>
    %c0_12 = arith.constant 0 : index
    %c0_13 = arith.constant 0 : index
    %15 = vector.load %arg5[%c0_12, %c0_13] : memref<128x64xf32, #tpu.memory_space<vmem>>, vector<128x64xf32>
    %cst_14 = arith.constant dense<0.000000e+00> : vector<2x64xf32>
    %16 = tpu.matmul %14, %15, %cst_14 {dimension_numbers = #tpu.dot_dimension_numbers<[1], [0], [0], [1], [0, 0, 1, 1], [], []>} : vector<2x128xf32>, vector<128x64xf32>, vector<2x64xf32> -> vector<2x64xf32>
    %c0_15 = arith.constant 0 : index
    %c0_16 = arith.constant 0 : index
    %17 = vector.load %arg6[%c0_15, %c0_16] : memref<1x64xf32, #tpu.memory_space<vmem>>, vector<1x64xf32>
    %18 = vector.broadcast %17 : vector<1x64xf32> to vector<2x64xf32>
    %19 = arith.addf %16, %18 : vector<2x64xf32>
    %cst_17 = arith.constant 0.000000e+00 : f32
    %20 = vector.broadcast %cst_17 : f32 to vector<2x64xf32>
    %21 = arith.maximumf %19, %20 : vector<2x64xf32>
    %c0_18 = arith.constant 0 : index
    %c0_19 = arith.constant 0 : index
    %22 = vector.load %arg7[%c0_18, %c0_19] : memref<64x128xf32, #tpu.memory_space<vmem>>, vector<64x128xf32>
    %cst_20 = arith.constant dense<0.000000e+00> : vector<2x128xf32>
    %23 = tpu.matmul %21, %22, %cst_20 {dimension_numbers = #tpu.dot_dimension_numbers<[1], [0], [0], [1], [0, 0, 1, 1], [], []>} : vector<2x64xf32>, vector<64x128xf32>, vector<2x128xf32> -> vector<2x128xf32>
    %c0_21 = arith.constant 0 : index
    %c0_22 = arith.constant 0 : index
    %24 = vector.load %arg8[%c0_21, %c0_22] : memref<1x128xf32, #tpu.memory_space<vmem>>, vector<1x128xf32>
    %25 = vector.broadcast %24 : vector<1x128xf32> to vector<2x128xf32>
    %26 = arith.addf %23, %25 : vector<2x128xf32>
    %c0_23 = arith.constant 0 : index
    %c0_24 = arith.constant 0 : index
    %27 = vector.load %arg9[%c0_23, %c0_24] : memref<2x128xf32, #tpu.memory_space<vmem>>, vector<2x128xf32>
    tpu.vector_store %arg9[%c0_23, %c0_24], %26 {strides = array<i32>} : memref<2x128xf32, #tpu.memory_space<vmem>>, vector<2x128xf32>,
    return
  }
}

</mosaic_0001>

<llo_original>
// kernel: forward.1
$region0: #{forward.1}
  #allocation0 [shape = 'u32[]', space=smem, size = 0x4, offset = 0x4, fixed_abs, tag = 'smem constant byte address 0x4 - core index']
  #allocation1 [shape = 'u32[72,128]{1,0:T(1,128)}', space=vmem, size = 0x9000, scoped, tag = 'internal scratch']
  %s0 = inlined_call_operand.vmem [shape: f32[2,256], index: 0, kind: input, shape index: {}]
  %s1 = inlined_call_operand.hbm [shape: f32[256,128], index: 1, kind: input, shape index: {}]
  %s2 = inlined_call_operand.vmem [shape: f32[1,128], index: 2, kind: input, shape index: {}]
  %s3 = inlined_call_operand.vmem [shape: f32[128,128], index: 3, kind: input, shape index: {}]
  %s4 = inlined_call_operand.hbm [shape: f32[1,128], index: 4, kind: input, shape index: {}]
  %s5 = inlined_call_operand.vmem [shape: f32[128,64], index: 5, kind: input, shape index: {}]
  %s6 = inlined_call_operand.hbm [shape: f32[1,64], index: 6, kind: input, shape index: {}]
  %s7 = inlined_call_operand.vmem [shape: f32[64,128], index: 7, kind: input, shape index: {}]
  %s8 = inlined_call_operand.hbm [shape: f32[1,128], index: 8, kind: input, shape index: {}]
  %s9 = inlined_call_operand.vmem [shape: f32[2,128], index: 9, kind: output, shape index: {}]
  %s10 = sld [smem:[#allocation0]]
  $region62: #{forward.1} parent=0
    _
  %s12 = ssub.s32 1, %s10
  %s13 = scalar_select 0, %s12, %s10
  $region1: #{forward.1} parent=0
    #allocation2 [shape = 'u8[131072]{0}', space=vmem, size = 0x20000, scoped, tag = 'input window, operand 1, single buffered']
    #allocation3 [shape = 's32[1]{0}', space=sflag, size = 0x4, scoped, tag = 'scoped memory for forward.1']
    #allocation4 [shape = 'u8[512]{0}', space=vmem, size = 0x400, scoped, tag = 'input window, operand 4, single buffered']
    #allocation5 [shape = 's32[1]{0}', space=sflag, size = 0x4, scoped, tag = 'scoped memory for forward.1']
    #allocation6 [shape = 'u8[512]{0}', space=vmem, size = 0x400, scoped, tag = 'input window, operand 6, single buffered']
    #allocation7 [shape = 'u8[512]{0}', space=vmem, size = 0x400, scoped, tag = 'input window, operand 8, single buffered']
    #allocation8 [shape = 's32[1]{0}', space=sflag, size = 0x4, scoped, tag = 'scoped memory for forward.1']
    %14 = vsyncpa [#allocation3], 0
    %15 = vsyncpa [#allocation5], 0
    %16 = vsyncpa [#allocation8], 0
    // Predicated region
    $region2: #{forward.1} parent=1 // pred_check
      _
    $region3: #{forward.1} parent=1 // pred_check_branch
      %18 = sbr.rel (0) target = $region5
    $region4: #{forward.1} parent=1 // pred_region
      _
    $region5: #{forward.1} parent=1 // pred_fallthru
      _
    // Predicated region
    $region6: #{forward.1} parent=1 // pred_check
      _
    $region7: #{forward.1} parent=1 // pred_check_branch
      %20 = sbr.rel (0) target = $region9
    $region8: #{forward.1} parent=1 // pred_region
      %22 = vsyncadd [#allocation3], 0
      %s23 = sshll.u32 %s1, 4
      %s24 = int_to_ptr.hbm [resolvable:$true] %s23
      %s25 = sshll.u32 [#allocation2], 4
      %s26 = int_to_ptr.vmem [resolvable:$true] %s25
      %31 = dma.hbm_to_vmem [thread:$0]  %s24, 4096, %s26, [#allocation3], 128, 128, 8
    $region9: #{forward.1} parent=1 // pred_fallthru
      _
    // Predicated region
    $region10: #{forward.1} parent=1 // pred_check
      _
    $region11: #{forward.1} parent=1 // pred_check_branch
      %33 = sbr.rel (0) target = $region13
    $region12: #{forward.1} parent=1 // pred_region
      _
    $region13: #{forward.1} parent=1 // pred_fallthru
      _
    // Predicated region
    $region14: #{forward.1} parent=1 // pred_check
      _
    $region15: #{forward.1} parent=1 // pred_check_branch
      %35 = sbr.rel (0) target = $region17
    $region16: #{forward.1} parent=1 // pred_region
      _
    $region17: #{forward.1} parent=1 // pred_fallthru
      _
    // Predicated region
    $region18: #{forward.1} parent=1 // pred_check
      _
    $region19: #{forward.1} parent=1 // pred_check_branch
      %37 = sbr.rel (0) target = $region21
    $region20: #{forward.1} parent=1 // pred_region
      %39 = vsyncadd [#allocation5], 0
      %s41 = sshll.u32 %s4, 4
      %s42 = int_to_ptr.hbm [resolvable:$true] %s41
      %s43 = sshll.u32 [#allocation4], 4
      %s44 = int_to_ptr.vmem [resolvable:$true] %s43
      %46 = dma.hbm_to_vmem [thread:$0]  %s42, 16, %s44, [#allocation5]
    $region21: #{forward.1} parent=1 // pred_fallthru
      _
    // Predicated region
    $region22: #{forward.1} parent=1 // pred_check
      _
    $region23: #{forward.1} parent=1 // pred_check_branch
      %48 = sbr.rel (0) target = $region25
    $region24: #{forward.1} parent=1 // pred_region
      _
    $region25: #{forward.1} parent=1 // pred_fallthru
      _
    // Predicated region
    $region26: #{forward.1} parent=1 // pred_check
      _
    $region27: #{forward.1} parent=1 // pred_check_branch
      %50 = sbr.rel (0) target = $region29
    $region28: #{forward.1} parent=1 // pred_region
      %52 = vsyncadd [#allocation5], 0
      %s54 = sshll.u32 %s6, 4
      %s55 = int_to_ptr.hbm [resolvable:$true] %s54
      %s56 = sshll.u32 [#allocation6], 4
      %s57 = int_to_ptr.vmem [resolvable:$true] %s56
      %59 = dma.hbm_to_vmem [thread:$0]  %s55, 16, %s57, [#allocation5]
    $region29: #{forward.1} parent=1 // pred_fallthru
      _
    // Predicated region
    $region30: #{forward.1} parent=1 // pred_check
      _
    $region31: #{forward.1} parent=1 // pred_check_branch
      %61 = sbr.rel (0) target = $region33
    $region32: #{forward.1} parent=1 // pred_region
      _
    $region33: #{forward.1} parent=1 // pred_fallthru
      _
    // Predicated region
    $region34: #{forward.1} parent=1 // pred_check
      _
    $region35: #{forward.1} parent=1 // pred_check_branch
      %63 = sbr.rel (0) target = $region37
    $region36: #{forward.1} parent=1 // pred_region
      %65 = vsyncadd [#allocation8], 0
      %s67 = sshll.u32 %s8, 4
      %s68 = int_to_ptr.hbm [resolvable:$true] %s67
      %s69 = sshll.u32 [#allocation7], 4
      %s70 = int_to_ptr.vmem [resolvable:$true] %s69
      %72 = dma.hbm_to_vmem [thread:$0]  %s68, 16, %s70, [#allocation8]
    $region37: #{forward.1} parent=1 // pred_fallthru
      _
    // Predicated region
    $region38: #{forward.1} parent=1 // pred_check
      _
    $region39: #{forward.1} parent=1 // pred_check_branch
      %74 = sbr.rel (0) target = $region41
    $region40: #{forward.1} parent=1 // pred_region
      %76 = dma.done [#allocation3], 4096
    $region41: #{forward.1} parent=1 // pred_fallthru
      _
    // Predicated region
    $region42: #{forward.1} parent=1 // pred_check
      _
    $region43: #{forward.1} parent=1 // pred_check_branch
      %78 = sbr.rel (0) target = $region45
    $region44: #{forward.1} parent=1 // pred_region
      %80 = dma.done [#allocation5], 16
    $region45: #{forward.1} parent=1 // pred_fallthru
      _
    // Predicated region
    $region46: #{forward.1} parent=1 // pred_check
      _
    $region47: #{forward.1} parent=1 // pred_check_branch
      %82 = sbr.rel (0) target = $region49
    $region48: #{forward.1} parent=1 // pred_region
      %84 = dma.done [#allocation5], 16
    $region49: #{forward.1} parent=1 // pred_fallthru
      _
    // Predicated region
    $region50: #{forward.1} parent=1 // pred_check
      _
    $region51: #{forward.1} parent=1 // pred_check_branch
      %86 = sbr.rel (0) target = $region53
    $region52: #{forward.1} parent=1 // pred_region
      %88 = dma.done [#allocation8], 16
    $region53: #{forward.1} parent=1 // pred_fallthru
      _
    %v89 = vld [vmem:[%s0] sm:$0xf]
    %v90 = vld [vmem:[#allocation2] sm:$0xff]
    %v91 = vld [vmem:[#allocation2 + $0x8] sm:$0xff]
    %v92 = vld [vmem:[#allocation2 + $0x10] sm:$0xff]
    %v93 = vld [vmem:[#allocation2 + $0x18] sm:$0xff]
    %v94 = vld [vmem:[#allocation2 + $0x20] sm:$0xff]
    %v95 = vld [vmem:[#allocation2 + $0x28] sm:$0xff]
    %v96 = vld [vmem:[#allocation2 + $0x30] sm:$0xff]
    %v97 = vld [vmem:[#allocation2 + $0x38] sm:$0xff]
    %v98 = vld [vmem:[#allocation2 + $0x40] sm:$0xff]
    %v99 = vld [vmem:[#allocation2 + $0x48] sm:$0xff]
    %v100 = vld [vmem:[#allocation2 + $0x50] sm:$0xff]
    %v101 = vld [vmem:[#allocation2 + $0x58] sm:$0xff]
    %v102 = vld [vmem:[#allocation2 + $0x60] sm:$0xff]
    %v103 = vld [vmem:[#allocation2 + $0x68] sm:$0xff]
    %v104 = vld [vmem:[#allocation2 + $0x70] sm:$0xff]
    %v105 = vld [vmem:[#allocation2 + $0x78] sm:$0xff]
    %v106 = vld [vmem:[#allocation2 + $0x80] sm:$0xff]
    %v107 = vld [vmem:[#allocation2 + $0x88] sm:$0xff]
    %v108 = vld [vmem:[#allocation2 + $0x90] sm:$0xff]
    %v109 = vld [vmem:[#allocation2 + $0x98] sm:$0xff]
    %v110 = vld [vmem:[#allocation2 + $0xa0] sm:$0xff]
    %v111 = vld [vmem:[#allocation2 + $0xa8] sm:$0xff]
    %v112 = vld [vmem:[#allocation2 + $0xb0] sm:$0xff]
    %v113 = vld [vmem:[#allocation2 + $0xb8] sm:$0xff]
    %v114 = vld [vmem:[#allocation2 + $0xc0] sm:$0xff]
    %v115 = vld [vmem:[#allocation2 + $0xc8] sm:$0xff]
    %v116 = vld [vmem:[#allocation2 + $0xd0] sm:$0xff]
    %v117 = vld [vmem:[#allocation2 + $0xd8] sm:$0xff]
    %v118 = vld [vmem:[#allocation2 + $0xe0] sm:$0xff]
    %v119 = vld [vmem:[#allocation2 + $0xe8] sm:$0xff]
    %v120 = vld [vmem:[#allocation2 + $0xf0] sm:$0xff]
    %v121 = vld [vmem:[#allocation2 + $0xf8] sm:$0xff]
    %v122 = vld [vmem:[%s2] sm:$0x1]
    %v124 = vperm.slane %v122, 0
    %127 = vst [vmem:[#allocation1] ss:$4 sm:$0xff] %v89
    %v128 = vld.sshfl [vmem:[#allocation1] sm:$0xff pattern:$0x73625140]
    %v129 = vld.sshfl [vmem:[#allocation1 + $0x8] sm:$0xff pattern:$0x73625140]
    %132 = vmatpush.msra.mxu0 %v105
    %133 = vmatpush.msra.mxu0 %v104
    %134 = vmatpush.msra.mxu0 %v103
    %135 = vmatpush.msra.mxu0 %v102
    %136 = vmatpush.msra.mxu0 %v101
    %137 = vmatpush.msra.mxu0 %v100
    %138 = vmatpush.msra.mxu0 %v99
    %139 = vmatpush.msra.mxu0 %v98
    %140 = vmatpush.msra.mxu0 %v97
    %141 = vmatpush.msra.mxu0 %v96
    %142 = vmatpush.msra.mxu0 %v95
    %143 = vmatpush.msra.mxu0 %v94
    %144 = vmatpush.msra.mxu0 %v93
    %145 = vmatpush.msra.mxu0 %v92
    %146 = vmatpush.msra.mxu0 %v91
    %147 = vmatpush.msra.mxu0 %v90
    %148 = vmatmul.f32.gmra.mxu0 %v128
    %v149 = vpop.f32.mrf.mxu0
    %v150 = vadd.f32 %v124, %v149
    %151 = vdwg.mxu0
    %152 = vmatpush.msra.mxu0 %v121
    %153 = vmatpush.msra.mxu0 %v120
    %154 = vmatpush.msra.mxu0 %v119
    %155 = vmatpush.msra.mxu0 %v118
    %156 = vmatpush.msra.mxu0 %v117
    %157 = vmatpush.msra.mxu0 %v116
    %158 = vmatpush.msra.mxu0 %v115
    %159 = vmatpush.msra.mxu0 %v114
    %160 = vmatpush.msra.mxu0 %v113
    %161 = vmatpush.msra.mxu0 %v112
    %162 = vmatpush.msra.mxu0 %v111
    %163 = vmatpush.msra.mxu0 %v110
    %164 = vmatpush.msra.mxu0 %v109
    %165 = vmatpush.msra.mxu0 %v108
    %166 = vmatpush.msra.mxu0 %v107
    %167 = vmatpush.msra.mxu0 %v106
    %168 = vmatmul.f32.gmra.mxu0 %v129
    %v169 = vpop.f32.mrf.mxu0
    %v170 = vadd.f32 %v150, %v169
    %171 = vdwg.mxu0
    %v172 = vmax.f32 %v170, 0.0
    %v173 = vld [vmem:[%s3] sm:$0xff]
    %v174 = vld [vmem:[%s3 + $0x8] sm:$0xff]
    %v175 = vld [vmem:[%s3 + $0x10] sm:$0xff]
    %v176 = vld [vmem:[%s3 + $0x18] sm:$0xff]
    %v177 = vld [vmem:[%s3 + $0x20] sm:$0xff]
    %v178 = vld [vmem:[%s3 + $0x28] sm:$0xff]
    %v179 = vld [vmem:[%s3 + $0x30] sm:$0xff]
    %v180 = vld [vmem:[%s3 + $0x38] sm:$0xff]
    %v181 = vld [vmem:[%s3 + $0x40] sm:$0xff]
    %v182 = vld [vmem:[%s3 + $0x48] sm:$0xff]
    %v183 = vld [vmem:[%s3 + $0x50] sm:$0xff]
    %v184 = vld [vmem:[%s3 + $0x58] sm:$0xff]
    %v185 = vld [vmem:[%s3 + $0x60] sm:$0xff]
    %v186 = vld [vmem:[%s3 + $0x68] sm:$0xff]
    %v187 = vld [vmem:[%s3 + $0x70] sm:$0xff]
    %v188 = vld [vmem:[%s3 + $0x78] sm:$0xff]
    %v189 = vld [vmem:[#allocation4] sm:$0x1]
    %v191 = vperm.slane %v189, 0
    %193 = vmatpush.msra.mxu0 %v188
    %194 = vmatpush.msra.mxu0 %v187
    %195 = vmatpush.msra.mxu0 %v186
    %196 = vmatpush.msra.mxu0 %v185
    %197 = vmatpush.msra.mxu0 %v184
    %198 = vmatpush.msra.mxu0 %v183
    %199 = vmatpush.msra.mxu0 %v182
    %200 = vmatpush.msra.mxu0 %v181
    %201 = vmatpush.msra.mxu0 %v180
    %202 = vmatpush.msra.mxu0 %v179
    %203 = vmatpush.msra.mxu0 %v178
    %204 = vmatpush.msra.mxu0 %v177
    %205 = vmatpush.msra.mxu0 %v176
    %206 = vmatpush.msra.mxu0 %v175
    %207 = vmatpush.msra.mxu0 %v174
    %208 = vmatpush.msra.mxu0 %v173
    %209 = vmatmul.f32.gmra.mxu0 %v172
    %v210 = vpop.f32.mrf.mxu0
    %v211 = vadd.f32 %v191, %v210
    %212 = vdwg.mxu0
    %v213 = vmax.f32 %v211, 0.0
    %v214 = vld [vmem:[%s5] sm:$0xff]
    %v215 = vld [vmem:[%s5 + $0x8] sm:$0xff]
    %v216 = vld [vmem:[%s5 + $0x10] sm:$0xff]
    %v217 = vld [vmem:[%s5 + $0x18] sm:$0xff]
    %v218 = vld [vmem:[%s5 + $0x20] sm:$0xff]
    %v219 = vld [vmem:[%s5 + $0x28] sm:$0xff]
    %v220 = vld [vmem:[%s5 + $0x30] sm:$0xff]
    %v221 = vld [vmem:[%s5 + $0x38] sm:$0xff]
    %v222 = vld [vmem:[%s5 + $0x40] sm:$0xff]
    %v223 = vld [vmem:[%s5 + $0x48] sm:$0xff]
    %v224 = vld [vmem:[%s5 + $0x50] sm:$0xff]
    %v225 = vld [vmem:[%s5 + $0x58] sm:$0xff]
    %v226 = vld [vmem:[%s5 + $0x60] sm:$0xff]
    %v227 = vld [vmem:[%s5 + $0x68] sm:$0xff]
    %v228 = vld [vmem:[%s5 + $0x70] sm:$0xff]
    %v229 = vld [vmem:[%s5 + $0x78] sm:$0xff]
    %v230 = vld [vmem:[#allocation6] sm:$0x1]
    %v232 = vperm.slane %v230, 0
    %234 = vmatpush.msra.mxu0 %v229
    %235 = vmatpush.msra.mxu0 %v228
    %236 = vmatpush.msra.mxu0 %v227
    %237 = vmatpush.msra.mxu0 %v226
    %238 = vmatpush.msra.mxu0 %v225
    %239 = vmatpush.msra.mxu0 %v224
    %240 = vmatpush.msra.mxu0 %v223
    %241 = vmatpush.msra.mxu0 %v222
    %242 = vmatpush.msra.mxu0 %v221
    %243 = vmatpush.msra.mxu0 %v220
    %244 = vmatpush.msra.mxu0 %v219
    %245 = vmatpush.msra.mxu0 %v218
    %246 = vmatpush.msra.mxu0 %v217
    %247 = vmatpush.msra.mxu0 %v216
    %248 = vmatpush.msra.mxu0 %v215
    %249 = vmatpush.msra.mxu0 %v214
    %250 = vmatmul.f32.gmra.mxu0 %v213
    %v251 = vpop.f32.mrf.mxu0
    %v252 = vadd.f32 %v232, %v251
    %253 = vdwg.mxu0
    %v254 = vmax.f32 %v252, 0.0
    %v255 = vld [vmem:[%s7] sm:$0xff]
    %v256 = vld [vmem:[%s7 + $0x8] sm:$0xff]
    %v257 = vld [vmem:[%s7 + $0x10] sm:$0xff]
    %v258 = vld [vmem:[%s7 + $0x18] sm:$0xff]
    %v259 = vld [vmem:[%s7 + $0x20] sm:$0xff]
    %v260 = vld [vmem:[%s7 + $0x28] sm:$0xff]
    %v261 = vld [vmem:[%s7 + $0x30] sm:$0xff]
    %v262 = vld [vmem:[%s7 + $0x38] sm:$0xff]
    %v263 = vld [vmem:[#allocation7] sm:$0x1]
    %v265 = vperm.slane %v263, 0
    %vm267 = vcmask 523264
    %v269 = vsel %vm267, %v254, 0
    %271 = vmatpush.msra.mxu0 0.0
    %272 = vmatpush.msra.mxu0 0.0
    %273 = vmatpush.msra.mxu0 0.0
    %274 = vmatpush.msra.mxu0 0.0
    %275 = vmatpush.msra.mxu0 0.0
    %276 = vmatpush.msra.mxu0 0.0
    %277 = vmatpush.msra.mxu0 0.0
    %278 = vmatpush.msra.mxu0 0.0
    %279 = vmatpush.msra.mxu0 %v262
    %280 = vmatpush.msra.mxu0 %v261
    %281 = vmatpush.msra.mxu0 %v260
    %282 = vmatpush.msra.mxu0 %v259
    %283 = vmatpush.msra.mxu0 %v258
    %284 = vmatpush.msra.mxu0 %v257
    %285 = vmatpush.msra.mxu0 %v256
    %286 = vmatpush.msra.mxu0 %v255
    %287 = vmatmul.f32.gmra.mxu0 %v269
    %v288 = vpop.f32.mrf.mxu0
    %v289 = vadd.f32 %v265, %v288
    %290 = vdwg.mxu0
    %291 = vst [vmem:[%s9] sm:$0x3] %v289
    // Predicated region
    $region54: #{forward.1} parent=1 // pred_check
      _
    $region55: #{forward.1} parent=1 // pred_check_branch
      %293 = sbr.rel (0) target = $region57
    $region56: #{forward.1} parent=1 // pred_region
      _
    $region57: #{forward.1} parent=1 // pred_fallthru
      _
    // Predicated region
    $region58: #{forward.1} parent=1 // pred_check
      _
    $region59: #{forward.1} parent=1 // pred_check_branch
      %295 = sbr.rel (0) target = $region61
    $region60: #{forward.1} parent=1 // pred_region
      _
    $region61: #{forward.1} parent=1 // pred_fallthru
      _
    %296 = vsyncpa [#allocation3], 1
    %297 = vsyncpa [#allocation5], 1
    %298 = vsyncpa [#allocation8], 1

</llo_original>
